<compile_context>
chip_gen: v6e
topology: v6e:2x2x1
jax: 0.10.0
libtpu: 0.0.40
codegen_flags: <defaults>
</compile_context>

<pallas_src>
import jax
import jax.numpy as jnp
from jax.experimental import pallas as pl
from jax.experimental.pallas import tpu as pltpu


def _qvalue_kernel(x_ref, a_ref,
                   w1_ref, b1_ref,
                   w2_ref, b2_ref,
                   w3_ref, b3_ref,
                   w4_ref, b4_ref,
                   out_ref):
    cdt = w1_ref.dtype   # MXU operand dtype (bf16 by default; f32 for parity)

    # fc1 + relu.  torch.cat fused in-kernel: lane concat in f32, one cast to
    # the MXU operand dtype, then a single dot against the full fc1 weight.
    cat = jnp.concatenate(
        [x_ref[...].astype(jnp.float32), a_ref[...].astype(jnp.float32)],
        axis=-1).astype(cdt)
    h1 = jnp.dot(cat, w1_ref[...], preferred_element_type=jnp.float32)
    h1 = jnp.maximum(h1 + b1_ref[...], 0.0)

    # fc2 + relu (activation cast back to the operand dtype on the VPU; the
    # accumulator stays f32).
    h2 = jnp.dot(h1.astype(cdt), w2_ref[...], preferred_element_type=jnp.float32)
    h2 = jnp.maximum(h2 + b2_ref[...], 0.0)

    # fc3 + relu
    h3 = jnp.dot(h2.astype(cdt), w3_ref[...], preferred_element_type=jnp.float32)
    h3 = jnp.maximum(h3 + b3_ref[...], 0.0)

    # fc_out: hidden -> 1, computed as w4_row @ h3^T (contraction over both
    # last dims) so the per-block result is already a lane-dense row.
    q = jax.lax.dot_general(
        w4_ref[...], h3.astype(cdt),
        dimension_numbers=(((1,), (1,)), ((), ())),
        preferred_element_type=jnp.float32) + b4_ref[...]        # (1, block_b)
    out_ref[...] = q.reshape(out_ref.shape).astype(out_ref.dtype)


def _round_up(v, m):
    return -(-v // m) * m


def _pick_block_b(B, requested, align):
    if B <= align:
        return B                       # block dim == full array dim is always legal
    if requested is None:
        # Big blocks amortize the ~0.35us/step grid overhead, but keep >=2
        # grid steps so the "parallel" batch axis shards across v7x's two TCs.
        requested = min(2048, _round_up(pl.cdiv(B, 2), align))
    bb = max(align, (requested // align) * align)
    return min(bb, _round_up(B, align))


def qvalue_net_forward(x, a, params, *, block_b=None,
                       compute_dtype=jnp.bfloat16):
    """x: (B, state_dim), a: (B, action_dim) -> (B, 1) float32 Q-values.

    compute_dtype only controls the MXU operand dtype (cast inside the
    kernel); accumulation, biases and ReLU are always f32.  Use jnp.float32
    for exact parity with the PyTorch module.
    """
    B, S = x.shape
    A = a.shape[1]
    (w1, b1), (w2, b2), (w3, b3), (w4, b4) = params

    # Weights are tiny (<20 KB), VMEM-resident across the whole grid via
    # constant index_maps; cast them once here.  x/a are streamed untouched
    # (no wrapper-side pad/astype HBM passes) and cast inside the kernel.
    w1c = w1.astype(compute_dtype)                     # (S+A, H1): concat fused in-kernel
    w2c = w2.astype(compute_dtype)
    w3c = w3.astype(compute_dtype)
    w4r = w4.reshape(1, -1).astype(compute_dtype)      # (1, H3) row
    b1f = b1.reshape(1, -1).astype(jnp.float32)
    b2f = b2.reshape(1, -1).astype(jnp.float32)
    b3f = b3.reshape(1, -1).astype(jnp.float32)
    b4f = b4.reshape(1, 1).astype(jnp.float32)

    # Sublane alignment for the streamed (BlockSpec'd) arrays: 8 for 4-byte,
    # 16 for 2-byte, 32 for 1-byte dtypes.
    itemsize = jnp.dtype(x.dtype).itemsize
    align = 8 if itemsize >= 4 else (16 if itemsize == 2 else 32)
    block_b = _pick_block_b(B, block_b, align)
    n_blocks = pl.cdiv(B, block_b)

    in_specs = [
        pl.BlockSpec((block_b, S), lambda i: (i, 0)),   # x: streamed per block
        pl.BlockSpec((block_b, A), lambda i: (i, 0)),   # a: streamed per block
        pl.BlockSpec(w1c.shape, lambda i: (0, 0)),      # weights / biases:
        pl.BlockSpec(b1f.shape, lambda i: (0, 0)),      #   VMEM-resident
        pl.BlockSpec(w2c.shape, lambda i: (0, 0)),
        pl.BlockSpec(b2f.shape, lambda i: (0, 0)),
        pl.BlockSpec(w3c.shape, lambda i: (0, 0)),
        pl.BlockSpec(b3f.shape, lambda i: (0, 0)),
        pl.BlockSpec(w4r.shape, lambda i: (0, 0)),
        pl.BlockSpec(b4f.shape, lambda i: (0, 0)),
    ]
    # Lane-dense output: one (1, 1, block_b) row per grid step.
    out_spec = pl.BlockSpec((1, 1, block_b), lambda i: (i, 0, 0))

    out = pl.pallas_call(
        _qvalue_kernel,
        out_shape=jax.ShapeDtypeStruct((n_blocks, 1, block_b), jnp.float32),
        grid_spec=pltpu.PrefetchScalarGridSpec(
            num_scalar_prefetch=0,
            grid=(n_blocks,),
            in_specs=in_specs,
            out_specs=out_spec,
        ),
        compiler_params=pltpu.CompilerParams(
            dimension_semantics=("parallel",),
            # With 128-lane VMEM padding, x/a blocks + spilled h1..h3 are
            # ~2-3 KB/row double-buffered => block_b=2048 is ~10 MB.  32 MiB
            # is explicit headroom that fits v5e/v6e/v7x (v7x phys = 64 MiB).
            vmem_limit_bytes=32 * 1024 * 1024,
        ),
    )(x, a, w1c, b1f, w2c, b2f, w3c, b3f, w4r, b4f)

    out = out.reshape(n_blocks * block_b)
    if n_blocks * block_b != B:
        out = out[:B]          # drop the ragged tail (4 B/row; inputs were never padded)
    return out.reshape(B, 1)


def init_params(key, state_dim, hidden_dim, action_dim):
    """Deterministic init mimicking torch.nn.Linear default U(-1/sqrt(fan_in), +).

    Weights stored as (in_features, out_features) for x @ W; biases as (1, out).
    Layout note: hidden widths of 32/64 fill only a fraction of the 128 VPU
    lanes / 256 MXU columns; padding hidden dims to lane multiples upstream is
    near-free extra capacity on the MXU."""
    dims = [
        (state_dim + action_dim, hidden_dim),    # fc1
        (hidden_dim, hidden_dim * 2),            # fc2
        (hidden_dim * 2, hidden_dim),            # fc3
        (hidden_dim, 1),                         # fc_out
    ]
    params = []
    for (fan_in, fan_out) in dims:
        key, kw, kb = jax.random.split(key, 3)
        bound = 1.0 / jnp.sqrt(jnp.float32(fan_in))
        w = jax.random.uniform(kw, (fan_in, fan_out), jnp.float32, -bound, bound)
        b = jax.random.uniform(kb, (1, fan_out), jnp.float32, -bound, bound)
        params.append((w, b))
    return params


def reference_forward(x, a, params):
    """Plain-JAX reference for correctness check."""
    h = jnp.concatenate([x, a], axis=1)
    (w1, b1), (w2, b2), (w3, b3), (w4, b4) = params
    h = jnp.maximum(h @ w1 + b1, 0.0)
    h = jnp.maximum(h @ w2 + b2, 0.0)
    h = jnp.maximum(h @ w3 + b3, 0.0)
    return h @ w4 + b4


if __name__ == "__main__":
    state_dim, hidden_dim, action_dim = 12, 32, 4
    batch = 8

    key = jax.random.PRNGKey(0)
    key, kx, ka, kp = jax.random.split(key, 4)
    x = jax.random.normal(kx, (batch, state_dim), jnp.float32)
    a = jax.random.normal(ka, (batch, action_dim), jnp.float32)
    params = init_params(kp, state_dim, hidden_dim, action_dim)
    ref = reference_forward(x, a, params)

    # Exact-parity f32 path (matches the PyTorch module numerically).
    out_f32 = jax.block_until_ready(
        qvalue_net_forward(x, a, params, compute_dtype=jnp.float32))
    assert out_f32.shape == (batch, 1), out_f32.shape
    assert jnp.allclose(out_f32, ref, atol=1e-4, rtol=1e-4), (out_f32, ref)

    # Default path: bf16 MXU operands cast in-kernel, f32 accumulation.
    out_bf16 = jax.block_until_ready(qvalue_net_forward(x, a, params))
    assert out_bf16.shape == (batch, 1), out_bf16.shape
    assert jnp.allclose(out_bf16, ref, atol=1e-1, rtol=1e-1), (out_bf16, ref)

    # Multi-block ragged path (grid > 1, no wrapper-side padding), f32 parity.
    key, kx2, ka2 = jax.random.split(key, 3)
    B2 = 20
    x2 = jax.random.normal(kx2, (B2, state_dim), jnp.float32)
    a2 = jax.random.normal(ka2, (B2, action_dim), jnp.float32)
    ref2 = reference_forward(x2, a2, params)
    out2 = jax.block_until_ready(
        qvalue_net_forward(x2, a2, params, compute_dtype=jnp.float32))
    assert out2.shape == (B2, 1), out2.shape
    assert jnp.allclose(out2, ref2, atol=1e-4, rtol=1e-4), (out2, ref2)

    # Multi-block ragged path with the default bf16 operands.
    out3 = jax.block_until_ready(qvalue_net_forward(x2, a2, params))
    assert out3.shape == (B2, 1), out3.shape
    assert jnp.allclose(out3, ref2, atol=1e-1, rtol=1e-1), (out3, ref2)

    print("KERNEL_OK")
</pallas_src>

<mosaic_0001>
module attributes {stable_mosaic.version = 11 : i64} {
  func.func @_qvalue_kernel(%arg0: i32, %arg1: memref<8x12xf32, #tpu.memory_space<vmem>>, %arg2: memref<8x4xf32, #tpu.memory_space<vmem>>, %arg3: memref<16x32xf32, #tpu.memory_space<vmem>>, %arg4: memref<1x32xf32, #tpu.memory_space<vmem>>, %arg5: memref<32x64xf32, #tpu.memory_space<vmem>>, %arg6: memref<1x64xf32, #tpu.memory_space<vmem>>, %arg7: memref<64x32xf32, #tpu.memory_space<vmem>>, %arg8: memref<1x32xf32, #tpu.memory_space<vmem>>, %arg9: memref<1x32xf32, #tpu.memory_space<vmem>>, %arg10: memref<1x1xf32, #tpu.memory_space<vmem>>, %arg11: memref<1x1x8xf32, #tpu.memory_space<vmem>>) attributes {dimension_semantics = [#tpu.dimension_semantics<parallel>], iteration_bounds = array<i64: 1>, scalar_prefetch = 0 : i64, scratch_operands = 0 : i64, tpu.core_type = #tpu.core_type<tc>, window_params = [{transform_indices = @transform_0, window_bounds = array<i64: 8, 12>}, {transform_indices = @transform_1, window_bounds = array<i64: 8, 4>}, {pipeline_mode = #tpu.pipeline_mode<synchronous>, transform_indices = @transform_2, window_bounds = array<i64: 16, 32>}, {pipeline_mode = #tpu.pipeline_mode<synchronous>, transform_indices = @transform_3, window_bounds = array<i64: 1, 32>}, {pipeline_mode = #tpu.pipeline_mode<synchronous>, transform_indices = @transform_4, window_bounds = array<i64: 32, 64>}, {pipeline_mode = #tpu.pipeline_mode<synchronous>, transform_indices = @transform_5, window_bounds = array<i64: 1, 64>}, {pipeline_mode = #tpu.pipeline_mode<synchronous>, transform_indices = @transform_6, window_bounds = array<i64: 64, 32>}, {pipeline_mode = #tpu.pipeline_mode<synchronous>, transform_indices = @transform_7, window_bounds = array<i64: 1, 32>}, {pipeline_mode = #tpu.pipeline_mode<synchronous>, transform_indices = @transform_8, window_bounds = array<i64: 1, 32>}, {pipeline_mode = #tpu.pipeline_mode<synchronous>, transform_indices = @transform_9, window_bounds = array<i64: 1, 1>}, {transform_indices = @transform_10, window_bounds = array<i64: 1, 1, 8>}]} {
    %c0 = arith.constant 0 : index
    %c0_0 = arith.constant 0 : index
    %0 = vector.load %arg1[%c0, %c0_0] : memref<8x12xf32, #tpu.memory_space<vmem>>, vector<8x12xf32>
    %c0_1 = arith.constant 0 : index
    %c0_2 = arith.constant 0 : index
    %1 = vector.load %arg2[%c0_1, %c0_2] : memref<8x4xf32, #tpu.memory_space<vmem>>, vector<8x4xf32>
    %2 = tpu.concatenate %0, %1 in 1 : vector<8x12xf32>, vector<8x4xf32> -> vector<8x16xf32>
    %c0_3 = arith.constant 0 : index
    %c0_4 = arith.constant 0 : index
    %3 = vector.load %arg3[%c0_3, %c0_4] : memref<16x32xf32, #tpu.memory_space<vmem>>, vector<16x32xf32>
    %cst = arith.constant dense<0.000000e+00> : vector<8x32xf32>
    %4 = tpu.matmul %2, %3, %cst {dimension_numbers = #tpu.dot_dimension_numbers<[1], [0], [0], [1], [0, 0, 1, 1], [], []>} : vector<8x16xf32>, vector<16x32xf32>, vector<8x32xf32> -> vector<8x32xf32>
    %c0_5 = arith.constant 0 : index
    %c0_6 = arith.constant 0 : index
    %5 = vector.load %arg4[%c0_5, %c0_6] : memref<1x32xf32, #tpu.memory_space<vmem>>, vector<1x32xf32>
    %6 = vector.broadcast %5 : vector<1x32xf32> to vector<8x32xf32>
    %7 = arith.addf %4, %6 : vector<8x32xf32>
    %cst_7 = arith.constant 0.000000e+00 : f32
    %8 = vector.broadcast %cst_7 : f32 to vector<8x32xf32>
    %9 = arith.maximumf %7, %8 : vector<8x32xf32>
    %c0_8 = arith.constant 0 : index
    %c0_9 = arith.constant 0 : index
    %10 = vector.load %arg5[%c0_8, %c0_9] : memref<32x64xf32, #tpu.memory_space<vmem>>, vector<32x64xf32>
    %cst_10 = arith.constant dense<0.000000e+00> : vector<8x64xf32>
    %11 = tpu.matmul %9, %10, %cst_10 {dimension_numbers = #tpu.dot_dimension_numbers<[1], [0], [0], [1], [0, 0, 1, 1], [], []>} : vector<8x32xf32>, vector<32x64xf32>, vector<8x64xf32> -> vector<8x64xf32>
    %c0_11 = arith.constant 0 : index
    %c0_12 = arith.constant 0 : index
    %12 = vector.load %arg6[%c0_11, %c0_12] : memref<1x64xf32, #tpu.memory_space<vmem>>, vector<1x64xf32>
    %13 = vector.broadcast %12 : vector<1x64xf32> to vector<8x64xf32>
    %14 = arith.addf %11, %13 : vector<8x64xf32>
    %cst_13 = arith.constant 0.000000e+00 : f32
    %15 = vector.broadcast %cst_13 : f32 to vector<8x64xf32>
    %16 = arith.maximumf %14, %15 : vector<8x64xf32>
    %c0_14 = arith.constant 0 : index
    %c0_15 = arith.constant 0 : index
    %17 = vector.load %arg7[%c0_14, %c0_15] : memref<64x32xf32, #tpu.memory_space<vmem>>, vector<64x32xf32>
    %cst_16 = arith.constant dense<0.000000e+00> : vector<8x32xf32>
    %18 = tpu.matmul %16, %17, %cst_16 {dimension_numbers = #tpu.dot_dimension_numbers<[1], [0], [0], [1], [0, 0, 1, 1], [], []>} : vector<8x64xf32>, vector<64x32xf32>, vector<8x32xf32> -> vector<8x32xf32>
    %c0_17 = arith.constant 0 : index
    %c0_18 = arith.constant 0 : index
    %19 = vector.load %arg8[%c0_17, %c0_18] : memref<1x32xf32, #tpu.memory_space<vmem>>, vector<1x32xf32>
    %20 = vector.broadcast %19 : vector<1x32xf32> to vector<8x32xf32>
    %21 = arith.addf %18, %20 : vector<8x32xf32>
    %cst_19 = arith.constant 0.000000e+00 : f32
    %22 = vector.broadcast %cst_19 : f32 to vector<8x32xf32>
    %23 = arith.maximumf %21, %22 : vector<8x32xf32>
    %c0_20 = arith.constant 0 : index
    %c0_21 = arith.constant 0 : index
    %24 = vector.load %arg9[%c0_20, %c0_21] : memref<1x32xf32, #tpu.memory_space<vmem>>, vector<1x32xf32>
    %cst_22 = arith.constant dense<0.000000e+00> : vector<1x8xf32>
    %25 = tpu.matmul %24, %23, %cst_22 {dimension_numbers = #tpu.dot_dimension_numbers<[1], [1], [0], [0], [0, 0, 1, 0], [], []>} : vector<1x32xf32>, vector<8x32xf32>, vector<1x8xf32> -> vector<1x8xf32>
    %c0_23 = arith.constant 0 : index
    %c0_24 = arith.constant 0 : index
    %26 = vector.load %arg10[%c0_23, %c0_24] : memref<1x1xf32, #tpu.memory_space<vmem>>, vector<1x1xf32>
    %27 = vector.broadcast %26 : vector<1x1xf32> to vector<1x8xf32>
    %28 = arith.addf %25, %27 : vector<1x8xf32>
    %29 = vector.shape_cast %28 : vector<1x8xf32> to vector<1x1x8xf32>
    %c0_25 = arith.constant 0 : index
    %c0_26 = arith.constant 0 : index
    %c0_27 = arith.constant 0 : index
    %30 = vector.load %arg11[%c0_25, %c0_26, %c0_27] : memref<1x1x8xf32, #tpu.memory_space<vmem>>, vector<1x1x8xf32>
    tpu.vector_store %arg11[%c0_25, %c0_26, %c0_27], %29 {strides = array<i32>} : memref<1x1x8xf32, #tpu.memory_space<vmem>>, vector<1x1x8xf32>,
    return
  }
  func.func @transform_0(%arg0: i32) -> (i32, i32) {
    %c0_i32 = arith.constant 0 : i32
    %c0_i32_0 = arith.constant 0 : i32
    return %arg0, %c0_i32 : i32, i32
  }
  func.func @transform_1(%arg0: i32) -> (i32, i32) {
    %c0_i32 = arith.constant 0 : i32
    %c0_i32_0 = arith.constant 0 : i32
    return %arg0, %c0_i32 : i32, i32
  }
  func.func @transform_2(%arg0: i32) -> (i32, i32) {
    %c0_i32 = arith.constant 0 : i32
    %c0_i32_0 = arith.constant 0 : i32
    %c0_i32_1 = arith.constant 0 : i32
    return %c0_i32, %c0_i32_0 : i32, i32
  }
  func.func @transform_3(%arg0: i32) -> (i32, i32) {
    %c0_i32 = arith.constant 0 : i32
    %c0_i32_0 = arith.constant 0 : i32
    %c0_i32_1 = arith.constant 0 : i32
    return %c0_i32, %c0_i32_0 : i32, i32
  }
  func.func @transform_4(%arg0: i32) -> (i32, i32) {
    %c0_i32 = arith.constant 0 : i32
    %c0_i32_0 = arith.constant 0 : i32
    %c0_i32_1 = arith.constant 0 : i32
    return %c0_i32, %c0_i32_0 : i32, i32
  }
  func.func @transform_5(%arg0: i32) -> (i32, i32) {
    %c0_i32 = arith.constant 0 : i32
    %c0_i32_0 = arith.constant 0 : i32
    %c0_i32_1 = arith.constant 0 : i32
    return %c0_i32, %c0_i32_0 : i32, i32
  }
  func.func @transform_6(%arg0: i32) -> (i32, i32) {
    %c0_i32 = arith.constant 0 : i32
    %c0_i32_0 = arith.constant 0 : i32
    %c0_i32_1 = arith.constant 0 : i32
    return %c0_i32, %c0_i32_0 : i32, i32
  }
  func.func @transform_7(%arg0: i32) -> (i32, i32) {
    %c0_i32 = arith.constant 0 : i32
    %c0_i32_0 = arith.constant 0 : i32
    %c0_i32_1 = arith.constant 0 : i32
    return %c0_i32, %c0_i32_0 : i32, i32
  }
  func.func @transform_8(%arg0: i32) -> (i32, i32) {
    %c0_i32 = arith.constant 0 : i32
    %c0_i32_0 = arith.constant 0 : i32
    %c0_i32_1 = arith.constant 0 : i32
    return %c0_i32, %c0_i32_0 : i32, i32
  }
  func.func @transform_9(%arg0: i32) -> (i32, i32) {
    %c0_i32 = arith.constant 0 : i32
    %c0_i32_0 = arith.constant 0 : i32
    %c0_i32_1 = arith.constant 0 : i32
    return %c0_i32, %c0_i32_0 : i32, i32
  }
  func.func @transform_10(%arg0: i32) -> (i32, i32, i32) {
    %c0_i32 = arith.constant 0 : i32
    %c0_i32_0 = arith.constant 0 : i32
    %c0_i32_1 = arith.constant 0 : i32
    return %arg0, %c0_i32, %c0_i32_0 : i32, i32, i32
  }
}

</mosaic_0001>

<llo_original>
// kernel: tpu_custom_call.1
$region0: #{tpu_custom_call.1}
  #allocation0 [shape = 'u32[]', space=smem, size = 0x4, offset = 0x4, fixed_abs, tag = 'smem constant byte address 0x4 - core index']
  #allocation1 [shape = 'u32[144,128]{1,0:T(1,128)}', space=vmem, size = 0x12000, scoped, tag = 'internal scratch']
  #allocation2 [shape = 'f32[1,1]{1,0:T(1,128)S(1)}', space=vmem, size = 0x200, scoped, tag = 'scoped memory for tpu_custom_call.1']
  %s0 = inlined_call_operand.vmem [shape: f32[8,12], index: 0, kind: input, shape index: {}]
  %s1 = inlined_call_operand.vmem [shape: f32[8,4], index: 1, kind: input, shape index: {}]
  %s2 = inlined_call_operand.vmem [shape: f32[16,32], index: 2, kind: input, shape index: {}]
  %s3 = inlined_call_operand.vmem [shape: f32[1,32], index: 3, kind: input, shape index: {}]
  %s4 = inlined_call_operand.vmem [shape: f32[32,64], index: 4, kind: input, shape index: {}]
  %s5 = inlined_call_operand.vmem [shape: f32[1,64], index: 5, kind: input, shape index: {}]
  %s6 = inlined_call_operand.vmem [shape: f32[64,32], index: 6, kind: input, shape index: {}]
  %s7 = inlined_call_operand.vmem [shape: f32[1,32], index: 7, kind: input, shape index: {}]
  %s8 = inlined_call_operand.vmem [shape: f32[1,32], index: 8, kind: input, shape index: {}]
  %s9 = inlined_call_operand.<no memory space> [shape: f32[1,1], index: 9, kind: input, shape index: {}]
  %s10 = inlined_call_operand.hbm [shape: f32[1,1,8], index: 10, kind: output, shape index: {}]
  %s11 = sld [smem:[#allocation0]]
  $region50: #{tpu_custom_call.1} parent=0
    _
  %s13 = ssub.s32 1, %s11
  %s14 = scalar_select 0, %s13, %s11
  %v15 = vstv %s9
  %16 = vst [vmem:[#allocation2] sm:$0x1] %v15
  $region1: #{tpu_custom_call.1} parent=0
    #allocation3 [shape = 'u8[512]{0}', space=vmem, size = 0x400, scoped, tag = 'output window, operand 0, single buffered']
    #allocation4 [shape = 's32[1]{0}', space=sflag, size = 0x4, scoped, tag = 'scoped memory for tpu_custom_call.1']
    %17 = vsyncpa [#allocation4], 0
    // Predicated region
    $region2: #{tpu_custom_call.1} parent=1 // pred_check
      _
    $region3: #{tpu_custom_call.1} parent=1 // pred_check_branch
      %19 = sbr.rel (0) target = $region5
    $region4: #{tpu_custom_call.1} parent=1 // pred_region
      _
    $region5: #{tpu_custom_call.1} parent=1 // pred_fallthru
      _
    // Predicated region
    $region6: #{tpu_custom_call.1} parent=1 // pred_check
      _
    $region7: #{tpu_custom_call.1} parent=1 // pred_check_branch
      %21 = sbr.rel (0) target = $region9
    $region8: #{tpu_custom_call.1} parent=1 // pred_region
      _
    $region9: #{tpu_custom_call.1} parent=1 // pred_fallthru
      _
    // Predicated region
    $region10: #{tpu_custom_call.1} parent=1 // pred_check
      _
    $region11: #{tpu_custom_call.1} parent=1 // pred_check_branch
      %23 = sbr.rel (0) target = $region13
    $region12: #{tpu_custom_call.1} parent=1 // pred_region
      _
    $region13: #{tpu_custom_call.1} parent=1 // pred_fallthru
      _
    // Predicated region
    $region14: #{tpu_custom_call.1} parent=1 // pred_check
      _
    $region15: #{tpu_custom_call.1} parent=1 // pred_check_branch
      %25 = sbr.rel (0) target = $region17
    $region16: #{tpu_custom_call.1} parent=1 // pred_region
      _
    $region17: #{tpu_custom_call.1} parent=1 // pred_fallthru
      _
    // Predicated region
    $region18: #{tpu_custom_call.1} parent=1 // pred_check
      _
    $region19: #{tpu_custom_call.1} parent=1 // pred_check_branch
      %27 = sbr.rel (0) target = $region21
    $region20: #{tpu_custom_call.1} parent=1 // pred_region
      _
    $region21: #{tpu_custom_call.1} parent=1 // pred_fallthru
      _
    // Predicated region
    $region22: #{tpu_custom_call.1} parent=1 // pred_check
      _
    $region23: #{tpu_custom_call.1} parent=1 // pred_check_branch
      %29 = sbr.rel (0) target = $region25
    $region24: #{tpu_custom_call.1} parent=1 // pred_region
      _
    $region25: #{tpu_custom_call.1} parent=1 // pred_fallthru
      _
    // Predicated region
    $region26: #{tpu_custom_call.1} parent=1 // pred_check
      _
    $region27: #{tpu_custom_call.1} parent=1 // pred_check_branch
      %31 = sbr.rel (0) target = $region29
    $region28: #{tpu_custom_call.1} parent=1 // pred_region
      _
    $region29: #{tpu_custom_call.1} parent=1 // pred_fallthru
      _
    // Predicated region
    $region30: #{tpu_custom_call.1} parent=1 // pred_check
      _
    $region31: #{tpu_custom_call.1} parent=1 // pred_check_branch
      %33 = sbr.rel (0) target = $region33
    $region32: #{tpu_custom_call.1} parent=1 // pred_region
      _
    $region33: #{tpu_custom_call.1} parent=1 // pred_fallthru
      _
    // Predicated region
    $region34: #{tpu_custom_call.1} parent=1 // pred_check
      _
    $region35: #{tpu_custom_call.1} parent=1 // pred_check_branch
      %35 = sbr.rel (0) target = $region37
    $region36: #{tpu_custom_call.1} parent=1 // pred_region
      _
    $region37: #{tpu_custom_call.1} parent=1 // pred_fallthru
      _
    // Predicated region
    $region38: #{tpu_custom_call.1} parent=1 // pred_check
      _
    $region39: #{tpu_custom_call.1} parent=1 // pred_check_branch
      %37 = sbr.rel (0) target = $region41
    $region40: #{tpu_custom_call.1} parent=1 // pred_region
      _
    $region41: #{tpu_custom_call.1} parent=1 // pred_fallthru
      _
    %v38 = vld [vmem:[%s0] sm:$0xff]
    %v39 = vld [vmem:[%s1] sm:$0xff]
    %41 = vrot.lane.b32.xlu0 %v39, 12
    %v42 = vpop.permute.xlu0 %41
    %vm44 = vcmask 97280
    %v45 = vsel %vm44, %v38, %v42
    %v46 = vld [vmem:[%s2] sm:$0xff]
    %v47 = vld [vmem:[%s2 + $0x8] sm:$0xff]
    %v48 = vld [vmem:[%s3] sm:$0x1]
    %v50 = vlaneseq
    %v51 = vshrl.u32 %v50, 7
    %v52 = vsub.s32 0, %v51
    %v53 = vrot.slane %v48, %v52
    %vm55 = vcmask 130048
    %v57 = vsel %vm55, %v45, 0
    %59 = vmatprep.subr.mxu0 0.0
    %60 = vmatpush1.msra.mxu0 0.0
    %61 = vmatprep.subr.mxu0 0.0
    %62 = vmatpush1.msra.mxu0 0.0
    %63 = vmatprep.subr.mxu0 0.0
    %64 = vmatpush1.msra.mxu0 0.0
    %65 = vmatprep.subr.mxu0 0.0
    %66 = vmatpush1.msra.mxu0 0.0
    %67 = vmatprep.subr.mxu0 0.0
    %68 = vmatpush1.msra.mxu0 0.0
    %69 = vmatprep.subr.mxu0 0.0
    %70 = vmatpush1.msra.mxu0 0.0
    %71 = vmatprep.subr.mxu0 0.0
    %72 = vmatpush1.msra.mxu0 0.0
    %73 = vmatprep.subr.mxu0 0.0
    %74 = vmatpush1.msra.mxu0 0.0
    %75 = vmatprep.subr.mxu0 0.0
    %76 = vmatpush1.msra.mxu0 0.0
    %77 = vmatprep.subr.mxu0 0.0
    %78 = vmatpush1.msra.mxu0 0.0
    %79 = vmatprep.subr.mxu0 0.0
    %80 = vmatpush1.msra.mxu0 0.0
    %81 = vmatprep.subr.mxu0 0.0
    %82 = vmatpush1.msra.mxu0 0.0
    %83 = vmatprep.subr.mxu0 0.0
    %84 = vmatpush1.msra.mxu0 0.0
    %85 = vmatprep.subr.mxu0 0.0
    %86 = vmatpush1.msra.mxu0 0.0
    %87 = vmatprep.subr.mxu0 0.0
    %88 = vmatpush1.msra.mxu0 %v47
    %89 = vmatprep.subr.mxu0 0.0
    %90 = vmatpush1.msra.mxu0 %v46
    %91 = vmatprep.subr.mxu0 0.0
    %92 = vmatpush2.msra.mxu0 0.0
    %93 = vmatprep.subr.mxu0 0.0
    %94 = vmatpush2.msra.mxu0 0.0
    %95 = vmatprep.subr.mxu0 0.0
    %96 = vmatpush2.msra.mxu0 0.0
    %97 = vmatprep.subr.mxu0 0.0
    %98 = vmatpush2.msra.mxu0 0.0
    %99 = vmatprep.subr.mxu0 0.0
    %100 = vmatpush2.msra.mxu0 0.0
    %101 = vmatprep.subr.mxu0 0.0
    %102 = vmatpush2.msra.mxu0 0.0
    %103 = vmatprep.subr.mxu0 0.0
    %104 = vmatpush2.msra.mxu0 0.0
    %105 = vmatprep.subr.mxu0 0.0
    %106 = vmatpush2.msra.mxu0 0.0
    %107 = vmatprep.subr.mxu0 0.0
    %108 = vmatpush2.msra.mxu0 0.0
    %109 = vmatprep.subr.mxu0 0.0
    %110 = vmatpush2.msra.mxu0 0.0
    %111 = vmatprep.subr.mxu0 0.0
    %112 = vmatpush2.msra.mxu0 0.0
    %113 = vmatprep.subr.mxu0 0.0
    %114 = vmatpush2.msra.mxu0 0.0
    %115 = vmatprep.subr.mxu0 0.0
    %116 = vmatpush2.msra.mxu0 0.0
    %117 = vmatprep.subr.mxu0 0.0
    %118 = vmatpush2.msra.mxu0 0.0
    %119 = vmatprep.subr.mxu0 0.0
    %120 = vmatpush2.msra.mxu0 0.0
    %121 = vmatprep.subr.mxu0 0.0
    %122 = vmatpush2.msra.mxu0 0.0
    %123 = vmatprep.mubr.f32.mxu0 0.0
    %124 = vmatmul.mubr.f32.gmra.mxu0 %v57
    %v125 = vpop.f32.mrf.mxu0
    %v126 = vadd.f32 %v53, %v125
    %v127 = vpop.f32.mrf.mxu0
    %128 = vdwg.mxu0
    %v129 = vmax.f32 %v126, 0.0
    %v130 = vld [vmem:[%s4] sm:$0xff]
    %v131 = vld [vmem:[%s4 + $0x8] sm:$0xff]
    %v132 = vld [vmem:[%s4 + $0x10] sm:$0xff]
    %v133 = vld [vmem:[%s4 + $0x18] sm:$0xff]
    %v134 = vld [vmem:[%s5] sm:$0x1]
    %v136 = vlaneseq
    %v137 = vshrl.u32 %v136, 7
    %v138 = vsub.s32 0, %v137
    %v139 = vrot.slane %v134, %v138
    %vm141 = vcmask 261120
    %v143 = vsel %vm141, %v129, 0
    %145 = vmatprep.subr.mxu0 0.0
    %146 = vmatpush1.msra.mxu0 0.0
    %147 = vmatprep.subr.mxu0 0.0
    %148 = vmatpush1.msra.mxu0 0.0
    %149 = vmatprep.subr.mxu0 0.0
    %150 = vmatpush1.msra.mxu0 0.0
    %151 = vmatprep.subr.mxu0 0.0
    %152 = vmatpush1.msra.mxu0 0.0
    %153 = vmatprep.subr.mxu0 0.0
    %154 = vmatpush1.msra.mxu0 0.0
    %155 = vmatprep.subr.mxu0 0.0
    %156 = vmatpush1.msra.mxu0 0.0
    %157 = vmatprep.subr.mxu0 0.0
    %158 = vmatpush1.msra.mxu0 0.0
    %159 = vmatprep.subr.mxu0 0.0
    %160 = vmatpush1.msra.mxu0 0.0
    %161 = vmatprep.subr.mxu0 0.0
    %162 = vmatpush1.msra.mxu0 0.0
    %163 = vmatprep.subr.mxu0 0.0
    %164 = vmatpush1.msra.mxu0 0.0
    %165 = vmatprep.subr.mxu0 0.0
    %166 = vmatpush1.msra.mxu0 0.0
    %167 = vmatprep.subr.mxu0 0.0
    %168 = vmatpush1.msra.mxu0 0.0
    %169 = vmatprep.subr.mxu0 0.0
    %170 = vmatpush1.msra.mxu0 %v133
    %171 = vmatprep.subr.mxu0 0.0
    %172 = vmatpush1.msra.mxu0 %v132
    %173 = vmatprep.subr.mxu0 0.0
    %174 = vmatpush1.msra.mxu0 %v131
    %175 = vmatprep.subr.mxu0 0.0
    %176 = vmatpush1.msra.mxu0 %v130
    %177 = vmatprep.subr.mxu0 0.0
    %178 = vmatpush2.msra.mxu0 0.0
    %179 = vmatprep.subr.mxu0 0.0
    %180 = vmatpush2.msra.mxu0 0.0
    %181 = vmatprep.subr.mxu0 0.0
    %182 = vmatpush2.msra.mxu0 0.0
    %183 = vmatprep.subr.mxu0 0.0
    %184 = vmatpush2.msra.mxu0 0.0
    %185 = vmatprep.subr.mxu0 0.0
    %186 = vmatpush2.msra.mxu0 0.0
    %187 = vmatprep.subr.mxu0 0.0
    %188 = vmatpush2.msra.mxu0 0.0
    %189 = vmatprep.subr.mxu0 0.0
    %190 = vmatpush2.msra.mxu0 0.0
    %191 = vmatprep.subr.mxu0 0.0
    %192 = vmatpush2.msra.mxu0 0.0
    %193 = vmatprep.subr.mxu0 0.0
    %194 = vmatpush2.msra.mxu0 0.0
    %195 = vmatprep.subr.mxu0 0.0
    %196 = vmatpush2.msra.mxu0 0.0
    %197 = vmatprep.subr.mxu0 0.0
    %198 = vmatpush2.msra.mxu0 0.0
    %199 = vmatprep.subr.mxu0 0.0
    %200 = vmatpush2.msra.mxu0 0.0
    %201 = vmatprep.subr.mxu0 0.0
    %202 = vmatpush2.msra.mxu0 0.0
    %203 = vmatprep.subr.mxu0 0.0
    %204 = vmatpush2.msra.mxu0 0.0
    %205 = vmatprep.subr.mxu0 0.0
    %206 = vmatpush2.msra.mxu0 0.0
    %207 = vmatprep.subr.mxu0 0.0
    %208 = vmatpush2.msra.mxu0 0.0
    %209 = vmatprep.mubr.f32.mxu0 0.0
    %210 = vmatmul.mubr.f32.gmra.mxu0 %v143
    %v211 = vpop.f32.mrf.mxu0
    %v212 = vadd.f32 %v139, %v211
    %v213 = vpop.f32.mrf.mxu0
    %214 = vdwg.mxu0
    %v215 = vmax.f32 %v212, 0.0
    %v216 = vld [vmem:[%s6] sm:$0xff]
    %v217 = vld [vmem:[%s6 + $0x8] sm:$0xff]
    %v218 = vld [vmem:[%s6 + $0x10] sm:$0xff]
    %v219 = vld [vmem:[%s6 + $0x18] sm:$0xff]
    %v220 = vld [vmem:[%s6 + $0x20] sm:$0xff]
    %v221 = vld [vmem:[%s6 + $0x28] sm:$0xff]
    %v222 = vld [vmem:[%s6 + $0x30] sm:$0xff]
    %v223 = vld [vmem:[%s6 + $0x38] sm:$0xff]
    %v224 = vld [vmem:[%s7] sm:$0x1]
    %v226 = vlaneseq
    %v227 = vshrl.u32 %v226, 7
    %v228 = vsub.s32 0, %v227
    %v229 = vrot.slane %v224, %v228
    %vm231 = vcmask 523264
    %v233 = vsel %vm231, %v215, 0
    %235 = vmatprep.subr.mxu0 0.0
    %236 = vmatpush1.msra.mxu0 0.0
    %237 = vmatprep.subr.mxu0 0.0
    %238 = vmatpush1.msra.mxu0 0.0
    %239 = vmatprep.subr.mxu0 0.0
    %240 = vmatpush1.msra.mxu0 0.0
    %241 = vmatprep.subr.mxu0 0.0
    %242 = vmatpush1.msra.mxu0 0.0
    %243 = vmatprep.subr.mxu0 0.0
    %244 = vmatpush1.msra.mxu0 0.0
    %245 = vmatprep.subr.mxu0 0.0
    %246 = vmatpush1.msra.mxu0 0.0
    %247 = vmatprep.subr.mxu0 0.0
    %248 = vmatpush1.msra.mxu0 0.0
    %249 = vmatprep.subr.mxu0 0.0
    %250 = vmatpush1.msra.mxu0 0.0
    %251 = vmatprep.subr.mxu0 0.0
    %252 = vmatpush1.msra.mxu0 %v223
    %253 = vmatprep.subr.mxu0 0.0
    %254 = vmatpush1.msra.mxu0 %v222
    %255 = vmatprep.subr.mxu0 0.0
    %256 = vmatpush1.msra.mxu0 %v221
    %257 = vmatprep.subr.mxu0 0.0
    %258 = vmatpush1.msra.mxu0 %v220
    %259 = vmatprep.subr.mxu0 0.0
    %260 = vmatpush1.msra.mxu0 %v219
    %261 = vmatprep.subr.mxu0 0.0
    %262 = vmatpush1.msra.mxu0 %v218
    %263 = vmatprep.subr.mxu0 0.0
    %264 = vmatpush1.msra.mxu0 %v217
    %265 = vmatprep.subr.mxu0 0.0
    %266 = vmatpush1.msra.mxu0 %v216
    %267 = vmatprep.subr.mxu0 0.0
    %268 = vmatpush2.msra.mxu0 0.0
    %269 = vmatprep.subr.mxu0 0.0
    %270 = vmatpush2.msra.mxu0 0.0
    %271 = vmatprep.subr.mxu0 0.0
    %272 = vmatpush2.msra.mxu0 0.0
    %273 = vmatprep.subr.mxu0 0.0
    %274 = vmatpush2.msra.mxu0 0.0
    %275 = vmatprep.subr.mxu0 0.0
    %276 = vmatpush2.msra.mxu0 0.0
    %277 = vmatprep.subr.mxu0 0.0
    %278 = vmatpush2.msra.mxu0 0.0
    %279 = vmatprep.subr.mxu0 0.0
    %280 = vmatpush2.msra.mxu0 0.0
    %281 = vmatprep.subr.mxu0 0.0
    %282 = vmatpush2.msra.mxu0 0.0
    %283 = vmatprep.subr.mxu0 0.0
    %284 = vmatpush2.msra.mxu0 0.0
    %285 = vmatprep.subr.mxu0 0.0
    %286 = vmatpush2.msra.mxu0 0.0
    %287 = vmatprep.subr.mxu0 0.0
    %288 = vmatpush2.msra.mxu0 0.0
    %289 = vmatprep.subr.mxu0 0.0
    %290 = vmatpush2.msra.mxu0 0.0
    %291 = vmatprep.subr.mxu0 0.0
    %292 = vmatpush2.msra.mxu0 0.0
    %293 = vmatprep.subr.mxu0 0.0
    %294 = vmatpush2.msra.mxu0 0.0
    %295 = vmatprep.subr.mxu0 0.0
    %296 = vmatpush2.msra.mxu0 0.0
    %297 = vmatprep.subr.mxu0 0.0
    %298 = vmatpush2.msra.mxu0 0.0
    %299 = vmatprep.mubr.f32.mxu0 0.0
    %300 = vmatmul.mubr.f32.gmra.mxu0 %v233
    %v301 = vpop.f32.mrf.mxu0
    %v302 = vadd.f32 %v229, %v301
    %v303 = vpop.f32.mrf.mxu0
    %304 = vdwg.mxu0
    %v305 = vmax.f32 %v302, 0.0
    %v306 = vld [vmem:[%s8] sm:$0x1]
    %v307 = vld [vmem:[#allocation2] sm:$0x1]
    %309 = vset.pattern.permute.xlu0 0
    %310 = vperm.xlu0 %309, %v307
    %v311 = vpop.permute.xlu0 %310
    %v313 = vlaneseq
    %v314 = vshrl.u32 %v313, 7
    %v315 = vsub.s32 0, %v314
    %v316 = vrot.slane %v311, %v315
    %v318 = vsel %vm141, %v306, 0
    %v321 = vsel %vm141, %v305, 0
    %323 = vmatprep.subr.mxu0 0.0
    %324 = vmatpush1.xpose.msra.mxu0 0.0
    %325 = vmatprep.subr.mxu0 0.0
    %326 = vmatpush1.xpose.msra.mxu0 0.0
    %327 = vmatprep.subr.mxu0 0.0
    %328 = vmatpush1.xpose.msra.mxu0 0.0
    %329 = vmatprep.subr.mxu0 0.0
    %330 = vmatpush1.xpose.msra.mxu0 0.0
    %331 = vmatprep.subr.mxu0 0.0
    %332 = vmatpush1.xpose.msra.mxu0 0.0
    %333 = vmatprep.subr.mxu0 0.0
    %334 = vmatpush1.xpose.msra.mxu0 0.0
    %335 = vmatprep.subr.mxu0 0.0
    %336 = vmatpush1.xpose.msra.mxu0 0.0
    %337 = vmatprep.subr.mxu0 0.0
    %338 = vmatpush1.xpose.msra.mxu0 0.0
    %339 = vmatprep.subr.mxu0 0.0
    %340 = vmatpush1.xpose.msra.mxu0 0.0
    %341 = vmatprep.subr.mxu0 0.0
    %342 = vmatpush1.xpose.msra.mxu0 0.0
    %343 = vmatprep.subr.mxu0 0.0
    %344 = vmatpush1.xpose.msra.mxu0 0.0
    %345 = vmatprep.subr.mxu0 0.0
    %346 = vmatpush1.xpose.msra.mxu0 0.0
    %347 = vmatprep.subr.mxu0 0.0
    %348 = vmatpush1.xpose.msra.mxu0 0.0
    %349 = vmatprep.subr.mxu0 0.0
    %350 = vmatpush1.xpose.msra.mxu0 0.0
    %351 = vmatprep.subr.mxu0 0.0
    %352 = vmatpush1.xpose.msra.mxu0 0.0
    %353 = vmatprep.subr.mxu0 0.0
    %354 = vmatpush1.xpose.msra.mxu0 %v321
    %355 = vmatprep.subr.mxu0 0.0
    %356 = vmatpush2.xpose.msra.mxu0 0.0
    %357 = vmatprep.subr.mxu0 0.0
    %358 = vmatpush2.xpose.msra.mxu0 0.0
    %359 = vmatprep.subr.mxu0 0.0
    %360 = vmatpush2.xpose.msra.mxu0 0.0
    %361 = vmatprep.subr.mxu0 0.0
    %362 = vmatpush2.xpose.msra.mxu0 0.0
    %363 = vmatprep.subr.mxu0 0.0
    %364 = vmatpush2.xpose.msra.mxu0 0.0
    %365 = vmatprep.subr.mxu0 0.0
    %366 = vmatpush2.xpose.msra.mxu0 0.0
    %367 = vmatprep.subr.mxu0 0.0
    %368 = vmatpush2.xpose.msra.mxu0 0.0
    %369 = vmatprep.subr.mxu0 0.0
    %370 = vmatpush2.xpose.msra.mxu0 0.0
    %371 = vmatprep.subr.mxu0 0.0
    %372 = vmatpush2.xpose.msra.mxu0 0.0
    %373 = vmatprep.subr.mxu0 0.0
    %374 = vmatpush2.xpose.msra.mxu0 0.0
    %375 = vmatprep.subr.mxu0 0.0
    %376 = vmatpush2.xpose.msra.mxu0 0.0
    %377 = vmatprep.subr.mxu0 0.0
    %378 = vmatpush2.xpose.msra.mxu0 0.0
    %379 = vmatprep.subr.mxu0 0.0
    %380 = vmatpush2.xpose.msra.mxu0 0.0
    %381 = vmatprep.subr.mxu0 0.0
    %382 = vmatpush2.xpose.msra.mxu0 0.0
    %383 = vmatprep.subr.mxu0 0.0
    %384 = vmatpush2.xpose.msra.mxu0 0.0
    %385 = vmatprep.subr.mxu0 0.0
    %386 = vmatpush2.xpose.msra.mxu0 0.0
    %387 = vmatprep.mubr.f32.mxu0 0.0
    %388 = vmatmul.mubr.f32.gmra.mxu0 %v318
    %v389 = vpop.f32.mrf.mxu0
    %v390 = vadd.f32 %v316, %v389
    %v391 = vpop.f32.mrf.mxu0
    %392 = vdwg.mxu0
    %vm393 = vcmask 57344
    %394 = vst.msk [vmem:[#allocation3] sm:$0x1] %vm393, %v390
    // Predicated region
    $region42: #{tpu_custom_call.1} parent=1 // pred_check
      _
    $region43: #{tpu_custom_call.1} parent=1 // pred_check_branch
      %396 = sbr.rel (0) target = $region45
    $region44: #{tpu_custom_call.1} parent=1 // pred_region
      %s398 = ssub.s32 16, 16
      %399 = vsyncadd [#allocation4], %s398
      %s401 = sshll.u32 [#allocation3], 4
      %s402 = int_to_ptr.vmem [resolvable:$true] %s401
      %404 = dma.vmem_to_hbm [thread:$0]  %s402, 16, %s10, [#allocation4]
    $region45: #{tpu_custom_call.1} parent=1 // pred_fallthru
      _
    // Predicated region
    $region46: #{tpu_custom_call.1} parent=1 // pred_check
      _
    $region47: #{tpu_custom_call.1} parent=1 // pred_check_branch
      %406 = sbr.rel (0) target = $region49
    $region48: #{tpu_custom_call.1} parent=1 // pred_region
      %407 = dma.done [#allocation4], 16
    $region49: #{tpu_custom_call.1} parent=1 // pred_fallthru
      _
    %408 = vsyncpa [#allocation4], 1

</llo_original>
